<compile_context>
chip_gen: v7x
topology: tpu7x:2x2x1
jax: 0.10.0
libtpu: 0.0.40
codegen_flags: <defaults>
</compile_context>

<pallas_src>
from functools import partial

import jax
import jax.numpy as jnp
from jax.experimental import pallas as pl
from jax.experimental.pallas import tpu as pltpu


def _round_up(x, m):
    return (x + m - 1) // m * m


def _pick_m_tile(m, target=256, min_steps=2):
    """Per-step M near `target`, but keep >= min_steps grid steps when possible."""
    if m >= target * min_steps:
        return target
    return max(8, _round_up(pl.cdiv(m, min_steps), 8))


# ------------------------------- Pallas kernel -------------------------------

def _matmul_bias_relu_kernel(x_ref, w_ref, b_ref, o_ref, acc_ref):
    """o = relu(x @ w + b), tiled; K reduction over grid axis 2.

    x_ref : (TM, TK)  bf16 im2col patch tile
    w_ref : (TK, TN)  bf16 BN-folded weight tile
    b_ref : (1,  TN)  f32 folded bias
    o_ref : (TM, TN)  f32 output tile
    acc_ref: (TM, TN) f32 VMEM accumulator scratch
    """
    @pl.when(pl.program_id(2) == 0)
    def _():
        acc_ref[...] = jnp.zeros_like(acc_ref)

    acc_ref[...] += jnp.dot(x_ref[...], w_ref[...],
                            preferred_element_type=jnp.float32)

    @pl.when(pl.program_id(2) == pl.num_programs(2) - 1)
    def _():
        o_ref[...] = jnp.maximum(acc_ref[...] + b_ref[...], 0.0).astype(o_ref.dtype)


# ------------------------------ Pallas wrapper -------------------------------

def conv_bn_relu(x_nhwc, w_hwio, bias, *, compute_dtype=jnp.bfloat16):
    """VALID kxk conv + folded-BN bias + ReLU.

    x_nhwc: (N,H,W,Cin) f32.  w_hwio: (k,k,Cin,Cout) with BN scale folded in.
    bias: (Cout,) folded bias.  Returns (N, Ho, Wo, Cout) f32.
    """
    N, H, W, Cin = x_nhwc.shape
    k = w_hwio.shape[0]
    Cout = w_hwio.shape[-1]
    Ho, Wo = H - k + 1, W - k + 1

    # Flattened contraction dim padded to a lane multiple ONCE.
    K = k * k * Cin
    Kp = _round_up(K, 128)
    cout_p = _round_up(Cout, 128)

    M = N * Ho * Wo
    TM = _pick_m_tile(M)
    Mp = _round_up(M, TM)
    TN = 256 if cout_p % 256 == 0 else 128        # 256-shaped N tiles when possible
    TK = min(Kp, 512)

    # Wrapper-side im2col, (ky, kx, cin) ordering along K (matches weight reshape).
    patches = jnp.concatenate(
        [x_nhwc[:, ky:ky + Ho, kx:kx + Wo, :] for ky in range(k) for kx in range(k)],
        axis=-1).reshape(M, K)
    lhs = jnp.pad(patches, ((0, Mp - M), (0, Kp - K))).astype(compute_dtype)
    rhs = jnp.pad(w_hwio.reshape(K, Cout),
                  ((0, Kp - K), (0, cout_p - Cout))).astype(compute_dtype)
    b2d = jnp.pad(bias.reshape(1, Cout), ((0, 0), (0, cout_p - Cout))).astype(jnp.float32)

    grid = (Mp // TM, cout_p // TN, Kp // TK)

    out = pl.pallas_call(
        _matmul_bias_relu_kernel,
        out_shape=jax.ShapeDtypeStruct((Mp, cout_p), jnp.float32),
        grid=grid,
        in_specs=[
            pl.BlockSpec((TM, TK), lambda i, j, kk: (i, kk)),
            pl.BlockSpec((TK, TN), lambda i, j, kk: (kk, j)),
            pl.BlockSpec((1, TN), lambda i, j, kk: (0, j)),
        ],
        out_specs=pl.BlockSpec((TM, TN), lambda i, j, kk: (i, j)),
        scratch_shapes=[pltpu.VMEM((TM, TN), jnp.float32)],
        compiler_params=pltpu.CompilerParams(
            dimension_semantics=("parallel", "parallel", "arbitrary")),
    )(lhs, rhs, b2d)

    return out[:M, :Cout].reshape(N, Ho, Wo, Cout)


# ------------------------------ Module forward -------------------------------

def conv_bn_relu1d_forward(params, x_nchw):
    """Mirrors ConvBNReLU1d.forward; NCHW in / NCHW out like PyTorch."""
    # TODO(synk): train-mode BatchNorm (batch statistics + running-stat updates)
    # is not reproduced; inference-mode running-stats fold only.
    eps = params["eps"]
    scale = params["gamma"] / jnp.sqrt(params["running_var"] + eps)        # (Cout,)
    w_fold = params["conv_w"] * scale                                      # fold BN scale
    b_fold = (params["conv_b"] - params["running_mean"]) * scale + params["beta"]
    x_nhwc = jnp.transpose(x_nchw, (0, 2, 3, 1))                           # NCHW -> NHWC
    out_nhwc = conv_bn_relu(x_nhwc, w_fold, b_fold)
    return jnp.transpose(out_nhwc, (0, 3, 1, 2))                           # back to NCHW


def _reference_forward(params, x_nchw):
    """Pure-JAX f32 reference of relu(bn(conv(x)))."""
    w_oihw = jnp.transpose(params["conv_w"], (3, 2, 0, 1))
    y = jax.lax.conv_general_dilated(
        x_nchw, w_oihw, window_strides=(1, 1), padding="VALID",
        dimension_numbers=("NCHW", "OIHW", "NCHW"))
    y = y + params["conv_b"][None, :, None, None]
    scale = params["gamma"] / jnp.sqrt(params["running_var"] + params["eps"])
    y = (y - params["running_mean"][None, :, None, None]) * scale[None, :, None, None]
    y = y + params["beta"][None, :, None, None]
    return jnp.maximum(y, 0.0)


# ------------------------------ Parameter init -------------------------------

def build_params(key, in_channels, inter_channels, kernel_size, eps=1e-5):
    k = kernel_size
    keys = jax.random.split(key, 6)
    fan_in = k * k * in_channels
    conv_w = jax.random.normal(keys[0], (k, k, in_channels, inter_channels),
                               jnp.float32) * (2.0 / fan_in) ** 0.5        # HWIO
    conv_b = 0.1 * jax.random.normal(keys[1], (inter_channels,), jnp.float32)
    gamma = 1.0 + 0.1 * jax.random.normal(keys[2], (inter_channels,), jnp.float32)
    beta = 0.1 * jax.random.normal(keys[3], (inter_channels,), jnp.float32)
    running_mean = 0.1 * jax.random.normal(keys[4], (inter_channels,), jnp.float32)
    running_var = 1.0 + 0.1 * jnp.abs(jax.random.normal(keys[5], (inter_channels,), jnp.float32))
    return {"conv_w": conv_w, "conv_b": conv_b, "gamma": gamma, "beta": beta,
            "running_mean": running_mean, "running_var": running_var, "eps": eps}


# ----------------------------------- main ------------------------------------

if __name__ == "__main__":
    key = jax.random.PRNGKey(0)
    k_inp, k_par = jax.random.split(key)

    N, Cin, H, W = 2, 4, 16, 16
    Cout, ksize = 32, 3
    x = jax.random.normal(k_inp, (N, Cin, H, W), jnp.float32)
    params = build_params(k_par, Cin, Cout, ksize)

    fwd = jax.jit(lambda inp: conv_bn_relu1d_forward(params, inp))
    out = jax.block_until_ready(fwd(x))

    Ho, Wo = H - ksize + 1, W - ksize + 1
    assert out.shape == (N, Cout, Ho, Wo), out.shape
    assert bool(jnp.all(jnp.isfinite(out)))

    ref = _reference_forward(params, x)
    err = float(jnp.max(jnp.abs(out - ref)))
    tol = 1e-2 * (1.0 + float(jnp.max(jnp.abs(ref))))   # bf16-operand relative tolerance
    assert err < tol, f"max abs error vs reference: {err} (tol {tol})"
    print("KERNEL_OK")
</pallas_src>

<mosaic_0001>
module attributes {stable_mosaic.version = 11 : i64} {
  func.func @_matmul_bias_relu_kernel(%arg0: i32, %arg1: i32, %arg2: i32, %arg3: memref<200x128xbf16, #tpu.memory_space<vmem>>, %arg4: memref<128x128xbf16, #tpu.memory_space<vmem>>, %arg5: memref<1x128xf32, #tpu.memory_space<vmem>>, %arg6: memref<200x128xf32, #tpu.memory_space<vmem>>, %arg7: memref<200x128xf32, #tpu.memory_space<vmem>>) attributes {dimension_semantics = [#tpu.dimension_semantics<parallel>, #tpu.dimension_semantics<parallel>, #tpu.dimension_semantics<arbitrary>], iteration_bounds = array<i64: 2, 1, 1>, scalar_prefetch = 0 : i64, scratch_operands = 1 : i64, tpu.core_type = #tpu.core_type<tc>, window_params = [{transform_indices = @transform_0, window_bounds = array<i64: 200, 128>}, {transform_indices = @transform_1, window_bounds = array<i64: 128, 128>}, {transform_indices = @transform_2, window_bounds = array<i64: 1, 128>}, {transform_indices = @transform_3, window_bounds = array<i64: 200, 128>}]} {
    %c0_i32 = arith.constant 0 : i32
    %0 = arith.cmpi eq, %arg2, %c0_i32 : i32
    %1 = arith.extui %0 : i1 to i32
    %c0_i32_0 = arith.constant 0 : i32
    %2 = arith.cmpi ne, %1, %c0_i32_0 : i32
    scf.if %2 {
      %cst_10 = arith.constant 0.000000e+00 : f32
      %12 = vector.broadcast %cst_10 : f32 to vector<200x128xf32>
      %c0_11 = arith.constant 0 : index
      %c0_12 = arith.constant 0 : index
      %13 = vector.load %arg7[%c0_11, %c0_12] : memref<200x128xf32, #tpu.memory_space<vmem>>, vector<200x128xf32>
      tpu.vector_store %arg7[%c0_11, %c0_12], %12 {strides = array<i32>} : memref<200x128xf32, #tpu.memory_space<vmem>>, vector<200x128xf32>,
    } else {
    }
    %c0 = arith.constant 0 : index
    %c0_1 = arith.constant 0 : index
    %3 = vector.load %arg7[%c0, %c0_1] : memref<200x128xf32, #tpu.memory_space<vmem>>, vector<200x128xf32>
    %c0_2 = arith.constant 0 : index
    %c0_3 = arith.constant 0 : index
    %4 = vector.load %arg3[%c0_2, %c0_3] : memref<200x128xbf16, #tpu.memory_space<vmem>>, vector<200x128xbf16>
    %c0_4 = arith.constant 0 : index
    %c0_5 = arith.constant 0 : index
    %5 = vector.load %arg4[%c0_4, %c0_5] : memref<128x128xbf16, #tpu.memory_space<vmem>>, vector<128x128xbf16>
    %cst = arith.constant dense<0.000000e+00> : vector<200x128xf32>
    %6 = tpu.matmul %4, %5, %cst {dimension_numbers = #tpu.dot_dimension_numbers<[1], [0], [0], [1], [0, 0, 1, 1], [], []>} : vector<200x128xbf16>, vector<128x128xbf16>, vector<200x128xf32> -> vector<200x128xf32>
    %7 = arith.addf %3, %6 : vector<200x128xf32>
    %c0_6 = arith.constant 0 : index
    %c0_7 = arith.constant 0 : index
    %8 = vector.load %arg7[%c0_6, %c0_7] : memref<200x128xf32, #tpu.memory_space<vmem>>, vector<200x128xf32>
    tpu.vector_store %arg7[%c0_6, %c0_7], %7 {strides = array<i32>} : memref<200x128xf32, #tpu.memory_space<vmem>>, vector<200x128xf32>,
    %c0_i32_8 = arith.constant 0 : i32
    %9 = arith.cmpi eq, %arg2, %c0_i32_8 : i32
    %10 = arith.extui %9 : i1 to i32
    %c0_i32_9 = arith.constant 0 : i32
    %11 = arith.cmpi ne, %10, %c0_i32_9 : i32
    scf.if %11 {
      %c0_10 = arith.constant 0 : index
      %c0_11 = arith.constant 0 : index
      %12 = vector.load %arg7[%c0_10, %c0_11] : memref<200x128xf32, #tpu.memory_space<vmem>>, vector<200x128xf32>
      %c0_12 = arith.constant 0 : index
      %c0_13 = arith.constant 0 : index
      %13 = vector.load %arg5[%c0_12, %c0_13] : memref<1x128xf32, #tpu.memory_space<vmem>>, vector<1x128xf32>
      %14 = vector.broadcast %13 : vector<1x128xf32> to vector<200x128xf32>
      %15 = arith.addf %12, %14 : vector<200x128xf32>
      %cst_14 = arith.constant 0.000000e+00 : f32
      %16 = vector.broadcast %cst_14 : f32 to vector<200x128xf32>
      %17 = arith.maximumf %15, %16 : vector<200x128xf32>
      %c0_15 = arith.constant 0 : index
      %c0_16 = arith.constant 0 : index
      %18 = vector.load %arg6[%c0_15, %c0_16] : memref<200x128xf32, #tpu.memory_space<vmem>>, vector<200x128xf32>
      tpu.vector_store %arg6[%c0_15, %c0_16], %17 {strides = array<i32>} : memref<200x128xf32, #tpu.memory_space<vmem>>, vector<200x128xf32>,
    } else {
    }
    return
  }
  func.func @transform_0(%arg0: i32, %arg1: i32, %arg2: i32) -> (i32, i32) {
    %c0_i32 = arith.constant 0 : i32
    return %arg0, %arg2 : i32, i32
  }
  func.func @transform_1(%arg0: i32, %arg1: i32, %arg2: i32) -> (i32, i32) {
    %c0_i32 = arith.constant 0 : i32
    return %arg2, %arg1 : i32, i32
  }
  func.func @transform_2(%arg0: i32, %arg1: i32, %arg2: i32) -> (i32, i32) {
    %c0_i32 = arith.constant 0 : i32
    %c0_i32_0 = arith.constant 0 : i32
    return %c0_i32, %arg1 : i32, i32
  }
  func.func @transform_3(%arg0: i32, %arg1: i32, %arg2: i32) -> (i32, i32) {
    %c0_i32 = arith.constant 0 : i32
    return %arg0, %arg1 : i32, i32
  }
}

</mosaic_0001>

<llo_original>
// kernel: _lambda_.1
$region0: #{_lambda_.1}
  #allocation0 [shape = 'u32[]', space=smem, size = 0x4, offset = 0x4, fixed_abs, tag = 'smem constant byte address 0x4 - core index']
  #allocation1 [shape = 'u32[144,128]{1,0:T(1,128)}', space=vmem, size = 0x12000, scoped, tag = 'internal scratch']
  #allocation2 [shape = 'f32[200,128]{1,0:T(8,128)}', space=vmem, size = 0x19000, scoped, tag = 'scratch operand']
  %s0 = inlined_call_operand.vmem [shape: bf16[400,128], index: 0, kind: input, shape index: {}]
  %s1 = inlined_call_operand.vmem [shape: bf16[128,128], index: 1, kind: input, shape index: {}]
  %s2 = inlined_call_operand.vmem [shape: f32[1,128], index: 2, kind: input, shape index: {}]
  %s3 = inlined_call_operand.vmem [shape: f32[400,128], index: 3, kind: output, shape index: {}]
  %s4 = sld [smem:[#allocation0]]
  $region53: #{_lambda_.1} parent=0
    _
  %s6 = ssub.s32 1, %s4
  %s7 = scalar_select 0, %s6, %s4
  loop: start=0, step=1, limit=4
  $region2: #{_lambda_.1} parent=0 // loop_pre_header
    _
  $region3: #{_lambda_.1} parent=0 // loop_header
    %s9 = sphi 0, %s13
    %p10 = scmp.ge.s32.totalorder %s9, 4
    %s16 = sphi 0, %s35
    %s17 = sphi 0, %s31
    %s18 = sphi 0, %s27
    %s19 = sphi 0, %s16
    %s20 = sphi 0, %s17
    %s21 = sphi 0, %s18
    %s22 = sphi 0, %s19
    %s23 = sphi 0, %s20
    %s24 = sphi 0, %s21
    %s40 = sphi 0, %s42
    %s43 = sphi 0, %s40
    %s44 = sphi 0, %s43
    %s60 = sphi 0, %s44
    %s68 = sphi 0, %s70
    %s71 = sphi 0, %s68
    %s72 = sphi 0, %s71
    %s88 = sphi 0, %s72
    %s94 = sphi 0, %s96
    %s97 = sphi 0, %s94
    %s98 = sphi 0, %s97
    %s114 = sphi 0, %s98
    %s122 = sphi 0, %s124
    %s125 = sphi 0, %s122
    %s126 = sphi 0, %s125
    %s142 = sphi 0, %s126
  $region4: #{_lambda_.1} parent=0 // loop_header_branch
    %12 = sbr.rel (%p10) target = $region8
  $region5: #{_lambda_.1} parent=0 // loop_body
    %s14 = ssub.s32 %s9, 1
    %s15 = ssub.s32 %s9, 2
    %s25 = sadd.s32 1, %s18
    %p26 = scmp.ge.s32.totalorder %s25, 1
    %s27 = scalar_select %p26, 0, %s25
    %s28 = sadd.s32 1, %s17
    %s29 = scalar_select %p26, %s28, %s17
    %p30 = scmp.ge.s32.totalorder %s29, 1
    %s31 = scalar_select %p30, 0, %s29
    %s32 = sadd.s32 1, %s16
    %s33 = scalar_select %p30, %s32, %s16
    %p34 = scmp.ge.s32.totalorder %s33, 2
    %s35 = scalar_select %p34, 0, %s33
    %s36 = ssub.s32 %s16, %s35
    %s37 = ssub.s32 %s18, %s27
    %s38 = sor.u32 %s36, %s37
    %p39 = scmp.eq.s32.totalorder %s38, 0
    %s41 = sadd.s32 %s40, 1
    %s42 = scalar_select %p39, %s40, %s41
    %p45 = pneg %p39
    %p46 = scmp.eq.s32.totalorder %s9, 1
    %p47 = por %p45, %p46
    %p48 = scmp.ne.s32.totalorder %s40, %s43
    %p49 = scmp.eq.s32.totalorder %s9, 0
    %p50 = por %p48, %p49
    %p51 = scmp.ne.s32.totalorder %s40, %s43
    %p52 = scmp.eq.s32.totalorder %s14, 1
    %p53 = por %p51, %p52
    %p54 = scmp.ne.s32.totalorder %s43, %s44
    %p55 = scmp.eq.s32.totalorder %s14, 0
    %p56 = por %p54, %p55
    %p57 = scmp.ne.s32.totalorder %s43, %s44
    %p58 = scmp.eq.s32.totalorder %s15, 1
    %p59 = por %p57, %p58
    %p61 = scmp.ne.s32.totalorder %s44, %s60
    %p62 = scmp.eq.s32.totalorder %s15, 0
    %p63 = por %p61, %p62
    %s64 = ssub.s32 %s18, %s27
    %s65 = ssub.s32 %s17, %s31
    %s66 = sor.u32 %s64, %s65
    %p67 = scmp.eq.s32.totalorder %s66, 0
    %s69 = sadd.s32 %s68, 1
    %s70 = scalar_select %p67, %s68, %s69
    %p73 = pneg %p67
    %p74 = scmp.eq.s32.totalorder %s9, 1
    %p75 = por %p73, %p74
    %p76 = scmp.ne.s32.totalorder %s68, %s71
    %p77 = scmp.eq.s32.totalorder %s9, 0
    %p78 = por %p76, %p77
    %p79 = scmp.ne.s32.totalorder %s68, %s71
    %p80 = scmp.eq.s32.totalorder %s14, 1
    %p81 = por %p79, %p80
    %p82 = scmp.ne.s32.totalorder %s71, %s72
    %p83 = scmp.eq.s32.totalorder %s14, 0
    %p84 = por %p82, %p83
    %p85 = scmp.ne.s32.totalorder %s71, %s72
    %p86 = scmp.eq.s32.totalorder %s15, 1
    %p87 = por %p85, %p86
    %p89 = scmp.ne.s32.totalorder %s72, %s88
    %p90 = scmp.eq.s32.totalorder %s15, 0
    %p91 = por %p89, %p90
    %s92 = ssub.s32 %s17, %s31
    %p93 = scmp.eq.s32.totalorder %s92, 0
    %s95 = sadd.s32 %s94, 1
    %s96 = scalar_select %p93, %s94, %s95
    %p99 = pneg %p93
    %p100 = scmp.eq.s32.totalorder %s9, 1
    %p101 = por %p99, %p100
    %p102 = scmp.ne.s32.totalorder %s94, %s97
    %p103 = scmp.eq.s32.totalorder %s9, 0
    %p104 = por %p102, %p103
    %p105 = scmp.ne.s32.totalorder %s94, %s97
    %p106 = scmp.eq.s32.totalorder %s14, 1
    %p107 = por %p105, %p106
    %p108 = scmp.ne.s32.totalorder %s97, %s98
    %p109 = scmp.eq.s32.totalorder %s14, 0
    %p110 = por %p108, %p109
    %p111 = scmp.ne.s32.totalorder %s97, %s98
    %p112 = scmp.eq.s32.totalorder %s15, 1
    %p113 = por %p111, %p112
    %p115 = scmp.ne.s32.totalorder %s98, %s114
    %p116 = scmp.eq.s32.totalorder %s15, 0
    %p117 = por %p115, %p116
    %s118 = ssub.s32 %s16, %s35
    %s119 = ssub.s32 %s17, %s31
    %s120 = sor.u32 %s118, %s119
    %p121 = scmp.eq.s32.totalorder %s120, 0
    %s123 = sadd.s32 %s122, 1
    %s124 = scalar_select %p121, %s122, %s123
    %p127 = pneg %p121
    %p128 = scmp.eq.s32.totalorder %s9, 1
    %p129 = por %p127, %p128
    %p130 = scmp.ne.s32.totalorder %s122, %s125
    %p131 = scmp.eq.s32.totalorder %s9, 0
    %p132 = por %p130, %p131
    %p133 = scmp.ne.s32.totalorder %s122, %s125
    %p134 = scmp.eq.s32.totalorder %s14, 1
    %p135 = por %p133, %p134
    %p136 = scmp.ne.s32.totalorder %s125, %s126
    %p137 = scmp.eq.s32.totalorder %s14, 0
    %p138 = por %p136, %p137
    %p139 = scmp.ne.s32.totalorder %s125, %s126
    %p140 = scmp.eq.s32.totalorder %s15, 1
    %p141 = por %p139, %p140
    %p143 = scmp.ne.s32.totalorder %s126, %s142
    %p144 = scmp.eq.s32.totalorder %s15, 0
    %p145 = por %p143, %p144
    %p146 = scmp.le.s32.totalorder 1, %s9
    %p147 = scmp.lt.s32.totalorder %s9, 3
    %p148 = pnand %p146, %p147
    %p149 = pneg %p148
    // Predicated region
    $region9: #{_lambda_.1} parent=5 // pred_check
      _
    $region10: #{_lambda_.1} parent=5 // pred_check_branch
      %151 = sbr.rel (%p148) target = $region12
    $region11: #{_lambda_.1} parent=5 // pred_region
      %s152 = ssub.s32 %s9, 1
      // Predicated region
      $region13: #{_lambda_.1} parent=11 // pred_check
        %p153 = pneg %p84
      $region14: #{_lambda_.1} parent=11 // pred_check_branch
        %155 = sbr.rel (%p153) target = $region16
      $region15: #{_lambda_.1} parent=11 // pred_region
        %s156 = smul.u32 16, %s21
        %p157 = scmp.lt.s32.totalorder %s156, 15
        %s158 = scalar_select %p157, %s156, 15
        %p159 = scmp.lt.s32.totalorder %s20, 0
        %s160 = scalar_select %p159, %s20, 0
        %s161 = sadd.s32 %s160, %s158
        %s162 = smul.addr %s161, 4
        %s163 = scalar_lea.vmem %s1, %s162
        %s164 = smul.u32 16, %s21
      $region16: #{_lambda_.1} parent=11 // pred_fallthru
        _
      // Predicated region
      $region17: #{_lambda_.1} parent=11 // pred_check
        %p165 = pneg %p110
      $region18: #{_lambda_.1} parent=11 // pred_check_branch
        %167 = sbr.rel (%p165) target = $region20
      $region19: #{_lambda_.1} parent=11 // pred_region
        %p168 = scmp.lt.s32.totalorder %s20, 0
        %s169 = scalar_select %p168, %s20, 0
        %s170 = scalar_lea.vmem %s2, %s169
      $region20: #{_lambda_.1} parent=11 // pred_fallthru
        _
    $region12: #{_lambda_.1} parent=5 // pred_fallthru
      _
    %p171 = scmp.lt.s32.totalorder %s9, 2
    // Predicated region
    $region21: #{_lambda_.1} parent=5 // pred_check
      %p172 = pneg %p171
    $region22: #{_lambda_.1} parent=5 // pred_check_branch
      %174 = sbr.rel (%p172) target = $region24
    $region23: #{_lambda_.1} parent=5 // pred_region
      // Predicated region
      $region25: #{_lambda_.1} parent=23 // pred_check
        %p175 = pneg %p50
      $region26: #{_lambda_.1} parent=23 // pred_check_branch
        %177 = sbr.rel (%p175) target = $region28
      $region27: #{_lambda_.1} parent=23 // pred_region
        %s178 = smul.u32 25, %s16
        %p179 = scmp.lt.s32.totalorder %s178, 49
        %s180 = scalar_select %p179, %s178, 49
        %p181 = scmp.lt.s32.totalorder %s18, 0
        %s182 = scalar_select %p181, %s18, 0
        %s183 = sadd.s32 %s182, %s180
        %s184 = smul.addr %s183, 4
        %s185 = scalar_lea.vmem %s0, %s184
        %s186 = smul.u32 25, %s16
      $region28: #{_lambda_.1} parent=23 // pred_fallthru
        _
    $region24: #{_lambda_.1} parent=5 // pred_fallthru
      _
    %p187 = scmp.le.s32.totalorder 1, %s9
    %p188 = scmp.lt.s32.totalorder %s9, 3
    %p189 = pnand %p187, %p188
    %p190 = pneg %p189
    // Predicated region
    $region29: #{_lambda_.1} parent=5 // pred_check
      _
    $region30: #{_lambda_.1} parent=5 // pred_check_branch
      %192 = sbr.rel (%p189) target = $region32
    $region31: #{_lambda_.1} parent=5 // pred_region
      %s193 = ssub.s32 %s9, 1
      %s194 = smul.u32 25, %s19
      %p195 = scmp.lt.s32.totalorder %s194, 49
      %s196 = scalar_select %p195, %s194, 49
      %p197 = scmp.lt.s32.totalorder %s21, 0
      %s198 = scalar_select %p197, %s21, 0
      %s199 = sadd.s32 %s198, %s196
      %s200 = smul.addr %s199, 4
      %s201 = scalar_lea.vmem %s0, %s200
      %p202 = pneg %p56
      %p203 = pneg %p53
      %s204 = smul.u32 16, %s21
      %p205 = scmp.lt.s32.totalorder %s204, 15
      %s206 = scalar_select %p205, %s204, 15
      %p207 = scmp.lt.s32.totalorder %s20, 0
      %s208 = scalar_select %p207, %s20, 0
      %s209 = sadd.s32 %s208, %s206
      %s210 = smul.addr %s209, 4
      %s211 = scalar_lea.vmem %s1, %s210
      %p212 = pneg %p84
      %p213 = pneg %p81
      %p214 = scmp.lt.s32.totalorder %s20, 0
      %s215 = scalar_select %p214, %s20, 0
      %s216 = scalar_lea.vmem %s2, %s215
      %p217 = pneg %p110
      %p218 = pneg %p107
      %p219 = pneg %p138
      %p220 = pneg %p135
      %s221 = smul.u32 25, %s19
      %p222 = scmp.lt.s32.totalorder %s221, 49
      %s223 = scalar_select %p222, %s221, 49
      %p224 = scmp.lt.s32.totalorder %s20, 0
      %s225 = scalar_select %p224, %s20, 0
      %s226 = sadd.s32 %s225, %s223
      %s227 = smul.addr %s226, 8
      %s228 = scalar_lea.vmem %s3, %s227
      %s229 = smul.u32 25, %s19
      %p230 = scmp.lt.s32.totalorder %s229, 49
      %s231 = scalar_select %p230, %s229, 49
      %p232 = scmp.lt.s32.totalorder %s21, 0
      %s233 = scalar_select %p232, %s21, 0
      %s234 = sadd.s32 %s233, %s231
      %s235 = smul.addr %s234, 4
      %s236 = scalar_lea.vmem %s0, %s235
      %s237 = smul.u32 25, %s19
      %s238 = smul.u32 16, %s21
      %p239 = scmp.lt.s32.totalorder %s238, 15
      %s240 = scalar_select %p239, %s238, 15
      %p241 = scmp.lt.s32.totalorder %s20, 0
      %s242 = scalar_select %p241, %s20, 0
      %s243 = sadd.s32 %s242, %s240
      %s244 = smul.addr %s243, 4
      %s245 = scalar_lea.vmem %s1, %s244
      %s246 = smul.u32 16, %s21
      %p247 = scmp.lt.s32.totalorder %s20, 0
      %s248 = scalar_select %p247, %s20, 0
      %s249 = scalar_lea.vmem %s2, %s248
      %s250 = smul.u32 25, %s19
      %p251 = scmp.lt.s32.totalorder %s250, 49
      %s252 = scalar_select %p251, %s250, 49
      %p253 = scmp.lt.s32.totalorder %s20, 0
      %s254 = scalar_select %p253, %s20, 0
      %s255 = sadd.s32 %s254, %s252
      %s256 = smul.addr %s255, 8
      %s257 = scalar_lea.vmem %s3, %s256
      %s258 = smul.u32 25, %s19
      %p260 = scmp.eq.s32.totalorder %s21, 0
      // Predicated region
      $region33: #{_lambda_.1} parent=31 // pred_check
        %p261 = pneg %p260
      $region34: #{_lambda_.1} parent=31 // pred_check_branch
        %263 = sbr.rel (%p261) target = $region36
      $region35: #{_lambda_.1} parent=31 // pred_region
        %264 = vst [vmem:[#allocation2] sm:$0xff] 0.0
        %265 = vst [vmem:[#allocation2 + $0x8] sm:$0xff] 0.0
        %266 = vst [vmem:[#allocation2 + $0x10] sm:$0xff] 0.0
        %267 = vst [vmem:[#allocation2 + $0x18] sm:$0xff] 0.0
        %268 = vst [vmem:[#allocation2 + $0x20] sm:$0xff] 0.0
        %269 = vst [vmem:[#allocation2 + $0x28] sm:$0xff] 0.0
        %270 = vst [vmem:[#allocation2 + $0x30] sm:$0xff] 0.0
        %271 = vst [vmem:[#allocation2 + $0x38] sm:$0xff] 0.0
        %272 = vst [vmem:[#allocation2 + $0x40] sm:$0xff] 0.0
        %273 = vst [vmem:[#allocation2 + $0x48] sm:$0xff] 0.0
        %274 = vst [vmem:[#allocation2 + $0x50] sm:$0xff] 0.0
        %275 = vst [vmem:[#allocation2 + $0x58] sm:$0xff] 0.0
        %276 = vst [vmem:[#allocation2 + $0x60] sm:$0xff] 0.0
        %277 = vst [vmem:[#allocation2 + $0x68] sm:$0xff] 0.0
        %278 = vst [vmem:[#allocation2 + $0x70] sm:$0xff] 0.0
        %279 = vst [vmem:[#allocation2 + $0x78] sm:$0xff] 0.0
        %280 = vst [vmem:[#allocation2 + $0x80] sm:$0xff] 0.0
        %281 = vst [vmem:[#allocation2 + $0x88] sm:$0xff] 0.0
        %282 = vst [vmem:[#allocation2 + $0x90] sm:$0xff] 0.0
        %283 = vst [vmem:[#allocation2 + $0x98] sm:$0xff] 0.0
        %284 = vst [vmem:[#allocation2 + $0xa0] sm:$0xff] 0.0
        %285 = vst [vmem:[#allocation2 + $0xa8] sm:$0xff] 0.0
        %286 = vst [vmem:[#allocation2 + $0xb0] sm:$0xff] 0.0
        %287 = vst [vmem:[#allocation2 + $0xb8] sm:$0xff] 0.0
        %288 = vst [vmem:[#allocation2 + $0xc0] sm:$0xff] 0.0
      $region36: #{_lambda_.1} parent=31 // pred_fallthru
        _
      %v289 = vld [vmem:[#allocation2] sm:$0xff]
      %v290 = vld [vmem:[#allocation2 + $0x8] sm:$0xff]
      %v291 = vld [vmem:[#allocation2 + $0x10] sm:$0xff]
      %v292 = vld [vmem:[#allocation2 + $0x18] sm:$0xff]
      %v293 = vld [vmem:[#allocation2 + $0x20] sm:$0xff]
      %v294 = vld [vmem:[#allocation2 + $0x28] sm:$0xff]
      %v295 = vld [vmem:[#allocation2 + $0x30] sm:$0xff]
      %v296 = vld [vmem:[#allocation2 + $0x38] sm:$0xff]
      %v297 = vld [vmem:[#allocation2 + $0x40] sm:$0xff]
      %v298 = vld [vmem:[#allocation2 + $0x48] sm:$0xff]
      %v299 = vld [vmem:[#allocation2 + $0x50] sm:$0xff]
      %v300 = vld [vmem:[#allocation2 + $0x58] sm:$0xff]
      %v301 = vld [vmem:[#allocation2 + $0x60] sm:$0xff]
      %v302 = vld [vmem:[#allocation2 + $0x68] sm:$0xff]
      %v303 = vld [vmem:[#allocation2 + $0x70] sm:$0xff]
      %v304 = vld [vmem:[#allocation2 + $0x78] sm:$0xff]
      %v305 = vld [vmem:[#allocation2 + $0x80] sm:$0xff]
      %v306 = vld [vmem:[#allocation2 + $0x88] sm:$0xff]
      %v307 = vld [vmem:[#allocation2 + $0x90] sm:$0xff]
      %v308 = vld [vmem:[#allocation2 + $0x98] sm:$0xff]
      %v309 = vld [vmem:[#allocation2 + $0xa0] sm:$0xff]
      %v310 = vld [vmem:[#allocation2 + $0xa8] sm:$0xff]
      %v311 = vld [vmem:[#allocation2 + $0xb0] sm:$0xff]
      %v312 = vld [vmem:[#allocation2 + $0xb8] sm:$0xff]
      %v313 = vld [vmem:[#allocation2 + $0xc0] sm:$0xff]
      %v314 = vld [vmem:[%s236] sm:$0xf]
      %v315 = vld [vmem:[%s236 + $0x4] sm:$0xf]
      %v316 = vld [vmem:[%s236 + $0x8] sm:$0xf]
      %v317 = vld [vmem:[%s236 + $0xc] sm:$0xf]
      %v318 = vld [vmem:[%s236 + $0x10] sm:$0xf]
      %v319 = vld [vmem:[%s236 + $0x14] sm:$0xf]
      %v320 = vld [vmem:[%s236 + $0x18] sm:$0xf]
      %v321 = vld [vmem:[%s236 + $0x1c] sm:$0xf]
      %v322 = vld [vmem:[%s236 + $0x20] sm:$0xf]
      %v323 = vld [vmem:[%s236 + $0x24] sm:$0xf]
      %v324 = vld [vmem:[%s236 + $0x28] sm:$0xf]
      %v325 = vld [vmem:[%s236 + $0x2c] sm:$0xf]
      %v326 = vld [vmem:[%s236 + $0x30] sm:$0xf]
      %v327 = vld [vmem:[%s236 + $0x34] sm:$0xf]
      %v328 = vld [vmem:[%s236 + $0x38] sm:$0xf]
      %v329 = vld [vmem:[%s236 + $0x3c] sm:$0xf]
      %v330 = vld [vmem:[%s236 + $0x40] sm:$0xf]
      %v331 = vld [vmem:[%s236 + $0x44] sm:$0xf]
      %v332 = vld [vmem:[%s236 + $0x48] sm:$0xf]
      %v333 = vld [vmem:[%s236 + $0x4c] sm:$0xf]
      %v334 = vld [vmem:[%s236 + $0x50] sm:$0xf]
      %v335 = vld [vmem:[%s236 + $0x54] sm:$0xf]
      %v336 = vld [vmem:[%s236 + $0x58] sm:$0xf]
      %v337 = vld [vmem:[%s236 + $0x5c] sm:$0xf]
      %v338 = vld [vmem:[%s236 + $0x60] sm:$0xf]
      %v339 = vld [vmem:[%s245] sm:$0xf]
      %v340 = vld [vmem:[%s245 + $0x4] sm:$0xf]
      %v341 = vld [vmem:[%s245 + $0x8] sm:$0xf]
      %v342 = vld [vmem:[%s245 + $0xc] sm:$0xf]
      %v343 = vld [vmem:[%s245 + $0x10] sm:$0xf]
      %v344 = vld [vmem:[%s245 + $0x14] sm:$0xf]
      %v345 = vld [vmem:[%s245 + $0x18] sm:$0xf]
      %v346 = vld [vmem:[%s245 + $0x1c] sm:$0xf]
      %v347 = vld [vmem:[%s245 + $0x20] sm:$0xf]
      %v348 = vld [vmem:[%s245 + $0x24] sm:$0xf]
      %v349 = vld [vmem:[%s245 + $0x28] sm:$0xf]
      %v350 = vld [vmem:[%s245 + $0x2c] sm:$0xf]
      %v351 = vld [vmem:[%s245 + $0x30] sm:$0xf]
      %v352 = vld [vmem:[%s245 + $0x34] sm:$0xf]
      %v353 = vld [vmem:[%s245 + $0x38] sm:$0xf]
      %v354 = vld [vmem:[%s245 + $0x3c] sm:$0xf]
      %v380 = vunpack.c.l.b16 %v314
      %v381 = vunpack.c.l.b16 %v315
      %v382 = vunpack.c.l.b16 %v316
      %v383 = vunpack.c.l.b16 %v317
      %v384 = vunpack.c.l.b16 %v318
      %v385 = vunpack.c.l.b16 %v319
      %v386 = vunpack.c.l.b16 %v320
      %v387 = vunpack.c.l.b16 %v321
      %v388 = vunpack.c.l.b16 %v322
      %v389 = vunpack.c.l.b16 %v323
      %v390 = vunpack.c.l.b16 %v324
      %v391 = vunpack.c.l.b16 %v325
      %v392 = vunpack.c.l.b16 %v326
      %v393 = vunpack.c.l.b16 %v327
      %v394 = vunpack.c.l.b16 %v328
      %v395 = vunpack.c.l.b16 %v329
      %v396 = vunpack.c.l.b16 %v330
      %v397 = vunpack.c.l.b16 %v331
      %v398 = vunpack.c.l.b16 %v332
      %v399 = vunpack.c.l.b16 %v333
      %v400 = vunpack.c.l.b16 %v334
      %v401 = vunpack.c.l.b16 %v335
      %v402 = vunpack.c.l.b16 %v336
      %v403 = vunpack.c.l.b16 %v337
      %v404 = vunpack.c.l.b16 %v338
      %v405 = vpack.c.b16 %v381, %v380
      %v406 = vpack.c.b16 %v383, %v382
      %v407 = vpack.c.b16 %v385, %v384
      %v408 = vpack.c.b16 %v387, %v386
      %v409 = vpack.c.b16 %v389, %v388
      %v410 = vpack.c.b16 %v391, %v390
      %v411 = vpack.c.b16 %v393, %v392
      %v412 = vpack.c.b16 %v395, %v394
      %v413 = vpack.c.b16 %v397, %v396
      %v414 = vpack.c.b16 %v399, %v398
      %v415 = vpack.c.b16 %v401, %v400
      %v416 = vpack.c.b16 %v403, %v402
      %v417 = vpack.c.b16 %v404, %v404
      %v447 = vunpack.c.l.b16 %v339
      %v448 = vunpack.c.l.b16 %v340
      %v449 = vunpack.c.l.b16 %v341
      %v450 = vunpack.c.l.b16 %v342
      %v451 = vunpack.c.l.b16 %v343
      %v452 = vunpack.c.l.b16 %v344
      %v453 = vunpack.c.l.b16 %v345
      %v454 = vunpack.c.l.b16 %v346
      %v455 = vunpack.c.l.b16 %v347
      %v456 = vunpack.c.l.b16 %v348
      %v457 = vunpack.c.l.b16 %v349
      %v458 = vunpack.c.l.b16 %v350
      %v459 = vunpack.c.l.b16 %v351
      %v460 = vunpack.c.l.b16 %v352
      %v461 = vunpack.c.l.b16 %v353
      %v462 = vunpack.c.l.b16 %v354
      %v463 = vpack.c.b16 %v448, %v447
      %v464 = vpack.c.b16 %v450, %v449
      %v465 = vpack.c.b16 %v452, %v451
      %v466 = vpack.c.b16 %v454, %v453
      %v467 = vpack.c.b16 %v456, %v455
      %v468 = vpack.c.b16 %v458, %v457
      %v469 = vpack.c.b16 %v460, %v459
      %v470 = vpack.c.b16 %v462, %v461
      %479 = vmatprep.subr.bf16.mxu0 0
      %480 = vmatpush1.bf16.msra.mxu0 %v463
      %481 = vmatprep.subr.bf16.mxu0 0
      %482 = vmatpush1.bf16.msra.mxu0 %v464
      %483 = vmatprep.subr.bf16.mxu0 0
      %484 = vmatpush1.bf16.msra.mxu0 %v465
      %485 = vmatprep.subr.bf16.mxu0 0
      %486 = vmatpush1.bf16.msra.mxu0 %v466
      %487 = vmatprep.subr.bf16.mxu0 0
      %488 = vmatpush1.bf16.msra.mxu0 %v467
      %489 = vmatprep.subr.bf16.mxu0 0
      %490 = vmatpush1.bf16.msra.mxu0 %v468
      %491 = vmatprep.subr.bf16.mxu0 0
      %492 = vmatpush1.bf16.msra.mxu0 %v469
      %493 = vmatprep.subr.bf16.mxu0 0
      %494 = vmatpush1.bf16.msra.mxu0 %v470
      %495 = vmatprep.subr.bf16.mxu0 0
      %496 = vmatpush1.bf16.msra.mxu0 0
      %497 = vmatprep.subr.bf16.mxu0 0
      %498 = vmatpush1.bf16.msra.mxu0 0
      %499 = vmatprep.subr.bf16.mxu0 0
      %500 = vmatpush1.bf16.msra.mxu0 0
      %501 = vmatprep.subr.bf16.mxu0 0
      %502 = vmatpush1.bf16.msra.mxu0 0
      %503 = vmatprep.subr.bf16.mxu0 0
      %504 = vmatpush1.bf16.msra.mxu0 0
      %505 = vmatprep.subr.bf16.mxu0 0
      %506 = vmatpush1.bf16.msra.mxu0 0
      %507 = vmatprep.subr.bf16.mxu0 0
      %508 = vmatpush1.bf16.msra.mxu0 0
      %509 = vmatprep.subr.bf16.mxu0 0
      %510 = vmatpush1.bf16.msra.mxu0 0
      %511 = vmatprep.mubr.bf16.mxu0 0
      %512 = vmatmul.mubr.bf16.gmra.mrb[0].mxu0 %v405
      %v513 = vpop.f32.mrb[0].mxu0
      %v514 = vadd.f32 0.0, %v513
      %v515 = vpop.f32.mrb[0].mxu0
      %v516 = vpop.f32.mrb[0].mxu0
      %v517 = vadd.f32 0.0, %v516
      %v518 = vpop.f32.mrb[0].mxu0
      %519 = vmatprep.mubr.bf16.mxu0 0
      %520 = vmatmul.mubr.bf16.gmra.mrb[0].mxu0 %v406
      %v521 = vpop.f32.mrb[0].mxu0
      %v522 = vadd.f32 0.0, %v521
      %v523 = vpop.f32.mrb[0].mxu0
      %v524 = vpop.f32.mrb[0].mxu0
      %v525 = vadd.f32 0.0, %v524
      %v526 = vpop.f32.mrb[0].mxu0
      %527 = vmatprep.mubr.bf16.mxu0 0
      %528 = vmatmul.mubr.bf16.gmra.mrb[0].mxu0 %v407
      %v529 = vpop.f32.mrb[0].mxu0
      %v530 = vadd.f32 0.0, %v529
      %v531 = vpop.f32.mrb[0].mxu0
      %v532 = vpop.f32.mrb[0].mxu0
      %v533 = vadd.f32 0.0, %v532
      %v534 = vpop.f32.mrb[0].mxu0
      %535 = vmatprep.mubr.bf16.mxu0 0
      %536 = vmatmul.mubr.bf16.gmra.mrb[0].mxu0 %v408
      %v537 = vpop.f32.mrb[0].mxu0
      %v538 = vadd.f32 0.0, %v537
      %v539 = vpop.f32.mrb[0].mxu0
      %v540 = vpop.f32.mrb[0].mxu0
      %v541 = vadd.f32 0.0, %v540
      %v542 = vpop.f32.mrb[0].mxu0
      %543 = vmatprep.mubr.bf16.mxu0 0
      %544 = vmatmul.mubr.bf16.gmra.mrb[0].mxu0 %v409
      %v545 = vpop.f32.mrb[0].mxu0
      %v546 = vadd.f32 0.0, %v545
      %v547 = vpop.f32.mrb[0].mxu0
      %v548 = vpop.f32.mrb[0].mxu0
      %v549 = vadd.f32 0.0, %v548
      %v550 = vpop.f32.mrb[0].mxu0
      %551 = vmatprep.mubr.bf16.mxu0 0
      %552 = vmatmul.mubr.bf16.gmra.mrb[0].mxu0 %v410
      %v553 = vpop.f32.mrb[0].mxu0
      %v554 = vadd.f32 0.0, %v553
      %v555 = vpop.f32.mrb[0].mxu0
      %v556 = vpop.f32.mrb[0].mxu0
      %v557 = vadd.f32 0.0, %v556
      %v558 = vpop.f32.mrb[0].mxu0
      %559 = vmatprep.mubr.bf16.mxu0 0
      %560 = vmatmul.mubr.bf16.gmra.mrb[0].mxu0 %v411
      %v561 = vpop.f32.mrb[0].mxu0
      %v562 = vadd.f32 0.0, %v561
      %v563 = vpop.f32.mrb[0].mxu0
      %v564 = vpop.f32.mrb[0].mxu0
      %v565 = vadd.f32 0.0, %v564
      %v566 = vpop.f32.mrb[0].mxu0
      %567 = vmatprep.mubr.bf16.mxu0 0
      %568 = vmatmul.mubr.bf16.gmra.mrb[0].mxu0 %v412
      %v569 = vpop.f32.mrb[0].mxu0
      %v570 = vadd.f32 0.0, %v569
      %v571 = vpop.f32.mrb[0].mxu0
      %v572 = vpop.f32.mrb[0].mxu0
      %v573 = vadd.f32 0.0, %v572
      %v574 = vpop.f32.mrb[0].mxu0
      %575 = vmatprep.mubr.bf16.mxu0 0
      %576 = vmatmul.mubr.bf16.gmra.mrb[0].mxu0 %v413
      %v577 = vpop.f32.mrb[0].mxu0
      %v578 = vadd.f32 0.0, %v577
      %v579 = vpop.f32.mrb[0].mxu0
      %v580 = vpop.f32.mrb[0].mxu0
      %v581 = vadd.f32 0.0, %v580
      %v582 = vpop.f32.mrb[0].mxu0
      %583 = vmatprep.mubr.bf16.mxu0 0
      %584 = vmatmul.mubr.bf16.gmra.mrb[0].mxu0 %v414
      %v585 = vpop.f32.mrb[0].mxu0
      %v586 = vadd.f32 0.0, %v585
      %v587 = vpop.f32.mrb[0].mxu0
      %v588 = vpop.f32.mrb[0].mxu0
      %v589 = vadd.f32 0.0, %v588
      %v590 = vpop.f32.mrb[0].mxu0
      %591 = vmatprep.mubr.bf16.mxu0 0
      %592 = vmatmul.mubr.bf16.gmra.mrb[0].mxu0 %v415
      %v593 = vpop.f32.mrb[0].mxu0
      %v594 = vadd.f32 0.0, %v593
      %v595 = vpop.f32.mrb[0].mxu0
      %v596 = vpop.f32.mrb[0].mxu0
      %v597 = vadd.f32 0.0, %v596
      %v598 = vpop.f32.mrb[0].mxu0
      %599 = vmatprep.mubr.bf16.mxu0 0
      %600 = vmatmul.mubr.bf16.gmra.mrb[0].mxu0 %v416
      %v601 = vpop.f32.mrb[0].mxu0
      %v602 = vadd.f32 0.0, %v601
      %v603 = vpop.f32.mrb[0].mxu0
      %v604 = vpop.f32.mrb[0].mxu0
      %v605 = vadd.f32 0.0, %v604
      %v606 = vpop.f32.mrb[0].mxu0
      %607 = vmatprep.mubr.bf16.mxu0 0
      %608 = vmatmul.mubr.bf16.gmra.mrb[0].mxu0 %v417
      %v609 = vpop.f32.mrb[0].mxu0
      %v610 = vadd.f32 0.0, %v609
      %v611 = vpop.f32.mrb[0].mxu0
      %v612 = vpop.f32.mrb[0].mxu0
      %v613 = vpop.f32.mrb[0].mxu0
      %614 = vdwg.mxu0
      %v615 = vadd.f32 %v289, %v514
      %v616 = vadd.f32 %v290, %v517
      %v617 = vadd.f32 %v291, %v522
      %v618 = vadd.f32 %v292, %v525
      %v619 = vadd.f32 %v293, %v530
      %v620 = vadd.f32 %v294, %v533
      %v621 = vadd.f32 %v295, %v538
      %v622 = vadd.f32 %v296, %v541
      %v623 = vadd.f32 %v297, %v546
      %v624 = vadd.f32 %v298, %v549
      %v625 = vadd.f32 %v299, %v554
      %v626 = vadd.f32 %v300, %v557
      %v627 = vadd.f32 %v301, %v562
      %v628 = vadd.f32 %v302, %v565
      %v629 = vadd.f32 %v303, %v570
      %v630 = vadd.f32 %v304, %v573
      %v631 = vadd.f32 %v305, %v578
      %v632 = vadd.f32 %v306, %v581
      %v633 = vadd.f32 %v307, %v586
      %v634 = vadd.f32 %v308, %v589
      %v635 = vadd.f32 %v309, %v594
      %v636 = vadd.f32 %v310, %v597
      %v637 = vadd.f32 %v311, %v602
      %v638 = vadd.f32 %v312, %v605
      %v639 = vadd.f32 %v313, %v610
      %640 = vst [vmem:[#allocation2] sm:$0xff] %v615
      %641 = vst [vmem:[#allocation2 + $0x8] sm:$0xff] %v616
      %642 = vst [vmem:[#allocation2 + $0x10] sm:$0xff] %v617
      %643 = vst [vmem:[#allocation2 + $0x18] sm:$0xff] %v618
      %644 = vst [vmem:[#allocation2 + $0x20] sm:$0xff] %v619
      %645 = vst [vmem:[#allocation2 + $0x28] sm:$0xff] %v620
      %646 = vst [vmem:[#allocation2 + $0x30] sm:$0xff] %v621
      %647 = vst [vmem:[#allocation2 + $0x38] sm:$0xff] %v622
      %648 = vst [vmem:[#allocation2 + $0x40] sm:$0xff] %v623
      %649 = vst [vmem:[#allocation2 + $0x48] sm:$0xff] %v624
      %650 = vst [vmem:[#allocation2 + $0x50] sm:$0xff] %v625
      %651 = vst [vmem:[#allocation2 + $0x58] sm:$0xff] %v626
      %652 = vst [vmem:[#allocation2 + $0x60] sm:$0xff] %v627
      %653 = vst [vmem:[#allocation2 + $0x68] sm:$0xff] %v628
      %654 = vst [vmem:[#allocation2 + $0x70] sm:$0xff] %v629
      %655 = vst [vmem:[#allocation2 + $0x78] sm:$0xff] %v630
      %656 = vst [vmem:[#allocation2 + $0x80] sm:$0xff] %v631
      %657 = vst [vmem:[#allocation2 + $0x88] sm:$0xff] %v632
      %658 = vst [vmem:[#allocation2 + $0x90] sm:$0xff] %v633
      %659 = vst [vmem:[#allocation2 + $0x98] sm:$0xff] %v634
      %660 = vst [vmem:[#allocation2 + $0xa0] sm:$0xff] %v635
      %661 = vst [vmem:[#allocation2 + $0xa8] sm:$0xff] %v636
      %662 = vst [vmem:[#allocation2 + $0xb0] sm:$0xff] %v637
      %663 = vst [vmem:[#allocation2 + $0xb8] sm:$0xff] %v638
      %664 = vst [vmem:[#allocation2 + $0xc0] sm:$0xff] %v639
      // Predicated region
      $region37: #{_lambda_.1} parent=31 // pred_check
        %p665 = pneg %p260
      $region38: #{_lambda_.1} parent=31 // pred_check_branch
        %667 = sbr.rel (%p665) target = $region40
      $region39: #{_lambda_.1} parent=31 // pred_region
        %v668 = vld [vmem:[#allocation2] sm:$0xff]
        %v669 = vld [vmem:[#allocation2 + $0x8] sm:$0xff]
        %v670 = vld [vmem:[#allocation2 + $0x10] sm:$0xff]
        %v671 = vld [vmem:[#allocation2 + $0x18] sm:$0xff]
        %v672 = vld [vmem:[#allocation2 + $0x20] sm:$0xff]
        %v673 = vld [vmem:[#allocation2 + $0x28] sm:$0xff]
        %v674 = vld [vmem:[#allocation2 + $0x30] sm:$0xff]
        %v675 = vld [vmem:[#allocation2 + $0x38] sm:$0xff]
        %v676 = vld [vmem:[#allocation2 + $0x40] sm:$0xff]
        %v677 = vld [vmem:[#allocation2 + $0x48] sm:$0xff]
        %v678 = vld [vmem:[#allocation2 + $0x50] sm:$0xff]
        %v679 = vld [vmem:[#allocation2 + $0x58] sm:$0xff]
        %v680 = vld [vmem:[#allocation2 + $0x60] sm:$0xff]
        %v681 = vld [vmem:[#allocation2 + $0x68] sm:$0xff]
        %v682 = vld [vmem:[#allocation2 + $0x70] sm:$0xff]
        %v683 = vld [vmem:[#allocation2 + $0x78] sm:$0xff]
        %v684 = vld [vmem:[#allocation2 + $0x80] sm:$0xff]
        %v685 = vld [vmem:[#allocation2 + $0x88] sm:$0xff]
        %v686 = vld [vmem:[#allocation2 + $0x90] sm:$0xff]
        %v687 = vld [vmem:[#allocation2 + $0x98] sm:$0xff]
        %v688 = vld [vmem:[#allocation2 + $0xa0] sm:$0xff]
        %v689 = vld [vmem:[#allocation2 + $0xa8] sm:$0xff]
        %v690 = vld [vmem:[#allocation2 + $0xb0] sm:$0xff]
        %v691 = vld [vmem:[#allocation2 + $0xb8] sm:$0xff]
        %v692 = vld [vmem:[#allocation2 + $0xc0] sm:$0xff]
        %v693 = vld [vmem:[%s249] sm:$0x1]
        %v695 = vlaneseq
        %v696 = vshrl.u32 %v695, 7
        %v697 = vsub.s32 0, %v696
        %v698 = vrot.slane %v693, %v697
        %v700 = vadd.f32 %v668, %v698
        %v701 = vadd.f32 %v669, %v698
        %v702 = vadd.f32 %v670, %v698
        %v703 = vadd.f32 %v671, %v698
        %v704 = vadd.f32 %v672, %v698
        %v705 = vadd.f32 %v673, %v698
        %v706 = vadd.f32 %v674, %v698
        %v707 = vadd.f32 %v675, %v698
        %v708 = vadd.f32 %v676, %v698
        %v709 = vadd.f32 %v677, %v698
        %v710 = vadd.f32 %v678, %v698
        %v711 = vadd.f32 %v679, %v698
        %v712 = vadd.f32 %v680, %v698
        %v713 = vadd.f32 %v681, %v698
        %v714 = vadd.f32 %v682, %v698
        %v715 = vadd.f32 %v683, %v698
        %v716 = vadd.f32 %v684, %v698
        %v717 = vadd.f32 %v685, %v698
        %v718 = vadd.f32 %v686, %v698
        %v719 = vadd.f32 %v687, %v698
        %v720 = vadd.f32 %v688, %v698
        %v721 = vadd.f32 %v689, %v698
        %v722 = vadd.f32 %v690, %v698
        %v723 = vadd.f32 %v691, %v698
        %v724 = vadd.f32 %v692, %v698
        %v725 = vmax.f32 %v700, 0.0
        %v726 = vmax.f32 %v701, 0.0
        %v727 = vmax.f32 %v702, 0.0
        %v728 = vmax.f32 %v703, 0.0
        %v729 = vmax.f32 %v704, 0.0
        %v730 = vmax.f32 %v705, 0.0
        %v731 = vmax.f32 %v706, 0.0
        %v732 = vmax.f32 %v707, 0.0
        %v733 = vmax.f32 %v708, 0.0
        %v734 = vmax.f32 %v709, 0.0
        %v735 = vmax.f32 %v710, 0.0
        %v736 = vmax.f32 %v711, 0.0
        %v737 = vmax.f32 %v712, 0.0
        %v738 = vmax.f32 %v713, 0.0
        %v739 = vmax.f32 %v714, 0.0
        %v740 = vmax.f32 %v715, 0.0
        %v741 = vmax.f32 %v716, 0.0
        %v742 = vmax.f32 %v717, 0.0
        %v743 = vmax.f32 %v718, 0.0
        %v744 = vmax.f32 %v719, 0.0
        %v745 = vmax.f32 %v720, 0.0
        %v746 = vmax.f32 %v721, 0.0
        %v747 = vmax.f32 %v722, 0.0
        %v748 = vmax.f32 %v723, 0.0
        %v749 = vmax.f32 %v724, 0.0
        %750 = vst [vmem:[%s257] sm:$0xff] %v725
        %751 = vst [vmem:[%s257 + $0x8] sm:$0xff] %v726
        %752 = vst [vmem:[%s257 + $0x10] sm:$0xff] %v727
        %753 = vst [vmem:[%s257 + $0x18] sm:$0xff] %v728
        %754 = vst [vmem:[%s257 + $0x20] sm:$0xff] %v729
        %755 = vst [vmem:[%s257 + $0x28] sm:$0xff] %v730
        %756 = vst [vmem:[%s257 + $0x30] sm:$0xff] %v731
        %757 = vst [vmem:[%s257 + $0x38] sm:$0xff] %v732
        %758 = vst [vmem:[%s257 + $0x40] sm:$0xff] %v733
        %759 = vst [vmem:[%s257 + $0x48] sm:$0xff] %v734
        %760 = vst [vmem:[%s257 + $0x50] sm:$0xff] %v735
        %761 = vst [vmem:[%s257 + $0x58] sm:$0xff] %v736
        %762 = vst [vmem:[%s257 + $0x60] sm:$0xff] %v737
        %763 = vst [vmem:[%s257 + $0x68] sm:$0xff] %v738
        %764 = vst [vmem:[%s257 + $0x70] sm:$0xff] %v739
        %765 = vst [vmem:[%s257 + $0x78] sm:$0xff] %v740
        %766 = vst [vmem:[%s257 + $0x80] sm:$0xff] %v741
        %767 = vst [vmem:[%s257 + $0x88] sm:$0xff] %v742
        %768 = vst [vmem:[%s257 + $0x90] sm:$0xff] %v743
        %769 = vst [vmem:[%s257 + $0x98] sm:$0xff] %v744
        %770 = vst [vmem:[%s257 + $0xa0] sm:$0xff] %v745
        %771 = vst [vmem:[%s257 + $0xa8] sm:$0xff] %v746
        %772 = vst [vmem:[%s257 + $0xb0] sm:$0xff] %v747
        %773 = vst [vmem:[%s257 + $0xb8] sm:$0xff] %v748
        %774 = vst [vmem:[%s257 + $0xc0] sm:$0xff] %v749
      $region40: #{_lambda_.1} parent=31 // pred_fallthru
        _
      %s775 = smul.u32 25, %s19
      %p776 = scmp.lt.s32.totalorder %s775, 49
      %s777 = scalar_select %p776, %s775, 49
      %p778 = scmp.lt.s32.totalorder %s20, 0
      %s779 = scalar_select %p778, %s20, 0
      %s780 = sadd.s32 %s779, %s777
      %s781 = smul.addr %s780, 8
      %s782 = scalar_lea.vmem %s3, %s781
      // Predicated region
      $region41: #{_lambda_.1} parent=31 // pred_check
        %p783 = pneg %p135
      $region42: #{_lambda_.1} parent=31 // pred_check_branch
        %785 = sbr.rel (%p783) target = $region44
      $region43: #{_lambda_.1} parent=31 // pred_region
        %s786 = smul.u32 25, %s19
      $region44: #{_lambda_.1} parent=31 // pred_fallthru
        _
    $region32: #{_lambda_.1} parent=5 // pred_fallthru
      _
    %p787 = scmp.le.s32.totalorder 2, %s9
    // Predicated region
    $region45: #{_lambda_.1} parent=5 // pred_check
      %p788 = pneg %p787
    $region46: #{_lambda_.1} parent=5 // pred_check_branch
      %790 = sbr.rel (%p788) target = $region48
    $region47: #{_lambda_.1} parent=5 // pred_region
      %s791 = ssub.s32 %s9, 2
      // Predicated region
      $region49: #{_lambda_.1} parent=47 // pred_check
        %p792 = pneg %p141
      $region50: #{_lambda_.1} parent=47 // pred_check_branch
        %794 = sbr.rel (%p792) target = $region52
      $region51: #{_lambda_.1} parent=47 // pred_region
        %s795 = smul.u32 25, %s22
        %p796 = scmp.lt.s32.totalorder %s795, 49
        %s797 = scalar_select %p796, %s795, 49
        %p798 = scmp.lt.s32.totalorder %s23, 0
        %s799 = scalar_select %p798, %s23, 0
        %s800 = sadd.s32 %s799, %s797
        %s801 = smul.addr %s800, 8
        %s802 = scalar_lea.vmem %s3, %s801
      $region52: #{_lambda_.1} parent=47 // pred_fallthru
        _
    $region48: #{_lambda_.1} parent=5 // pred_fallthru
      _
  $region6: #{_lambda_.1} parent=0 // loop_footer
    %s13 = sadd.s32 1, %s9
  $region7: #{_lambda_.1} parent=0 // loop_footer_branch
    %8 = sbr.rel target = $region3
  $region8: #{_lambda_.1} parent=0 // loop_exit
    _

</llo_original>
